<compile_context>
chip_gen: v7x
topology: tpu7x:2x2x1
jax: 0.10.0
libtpu: 0.0.40
codegen_flags: <defaults>
</compile_context>

<pallas_src>
import jax
import jax.numpy as jnp
from jax.experimental import pallas as pl
from jax.experimental.pallas import tpu as pltpu


def charrnn_kernel(x_ref, h0_ref, wih_t_ref, whh_t_ref, b_ref, wfc_t_ref, bfc_ref,
                   logits_ref, hout_ref, xproj_scr, h_all_scr):
    SB, H = xproj_scr.shape
    B = h0_ref.shape[0]
    S = SB // B

    # Phase 1 (off the serial chain): batched input projection + fused bias,
    # one (S*B, H) @ (H, H) MXU matmul covering all timesteps.
    xproj_scr[...] = (jnp.dot(x_ref[...], wih_t_ref[...],
                              preferred_element_type=jnp.float32)
                      + b_ref[...])

    # Phase 2: serial tanh recurrence. Only h @ W_hh^T + add + tanh stays on the
    # dependency chain; the W_hh^T load is hoisted out of the loop.
    whh_t = whh_t_ref[...]

    def step(t, h_prev):
        row0 = t * B
        pre = xproj_scr[pl.ds(row0, B), :] + jnp.dot(
            h_prev, whh_t, preferred_element_type=jnp.float32)
        h = jnp.tanh(pre)
        h_all_scr[pl.ds(row0, B), :] = h
        return h

    h_final = jax.lax.fori_loop(0, S, step, h0_ref[...], unroll=True)

    # Phase 3 (off the serial chain): deferred fc projection as one batched
    # (S*B, H) @ (H, O_pad) matmul with a lane-dense (O_pad % 128 == 0) output.
    logits_ref[...] = (jnp.dot(h_all_scr[...], wfc_t_ref[...],
                               preferred_element_type=jnp.float32)
                       + bfc_ref[...]).astype(logits_ref.dtype)

    # Final hidden written exactly once.
    hout_ref[...] = h_final.astype(hout_ref.dtype)


def char_rnn_forward(tokens, h0, params):
    """tokens: (B, S) int32, h0: (n_layers=1, B, H) f32.
    Returns (logits (B*S, O), hidden (1, B, H)) matching PyTorch CharRNN.forward."""
    B, S = tokens.shape
    H = params["w_ih"].shape[1]
    O = params["w_fc"].shape[0]
    O_pad = pl.cdiv(O, 128) * 128  # lane-dense logits output

    # Embedding gather (glue, not the hot path); time-major flatten: row = s*B + b.
    embedded = jnp.take(params["embedding"], tokens, axis=0)            # (B, S, H)
    x_tm = jnp.transpose(embedded, (1, 0, 2)).reshape(S * B, H)          # (S*B, H)

    # Pre-transpose weights so the kernel does plain row-major MXU dots;
    # pad the fc weight/bias to the lane-dense output width.
    wih_t = params["w_ih"].T                                             # (H, H)
    whh_t = params["w_hh"].T                                             # (H, H)
    b = (params["b_ih"] + params["b_hh"]).reshape(1, H)                  # (1, H)
    wfc_t = jnp.pad(params["w_fc"].T, ((0, 0), (0, O_pad - O)))          # (H, O_pad)
    bfc = jnp.pad(params["b_fc"], (0, O_pad - O)).reshape(1, O_pad)      # (1, O_pad)

    full = lambda i: (0, 0)

    logits_pad, h_final = pl.pallas_call(
        charrnn_kernel,
        out_shape=(jax.ShapeDtypeStruct((S * B, O_pad), jnp.float32),
                   jax.ShapeDtypeStruct((B, H), jnp.float32)),
        grid_spec=pltpu.PrefetchScalarGridSpec(
            num_scalar_prefetch=0,
            grid=(1,),                                   # single invocation
            in_specs=[
                pl.BlockSpec((S * B, H), full),          # embedded X (time-major)
                pl.BlockSpec((B, H), full),              # h0
                pl.BlockSpec((H, H), full),              # W_ih^T
                pl.BlockSpec((H, H), full),              # W_hh^T
                pl.BlockSpec((1, H), full),              # b_ih + b_hh
                pl.BlockSpec((H, O_pad), full),          # W_fc^T (lane-padded)
                pl.BlockSpec((1, O_pad), full),          # b_fc   (lane-padded)
            ],
            out_specs=[
                pl.BlockSpec((S * B, O_pad), full),      # logits (lane-dense)
                pl.BlockSpec((B, H), full),              # final hidden
            ],
            scratch_shapes=[
                pltpu.VMEM((S * B, H), jnp.float32),     # X @ W_ih^T + b (all steps)
                pltpu.VMEM((S * B, H), jnp.float32),     # all h_t
            ],
        ),
        compiler_params=pltpu.CompilerParams(
            dimension_semantics=("arbitrary",)),
    )(x_tm, h0[0], wih_t, whh_t, b, wfc_t, bfc)

    # Match PyTorch: output (B, S, O) reshaped to (B*S, O); hidden is (n_layers, B, H).
    logits = jnp.transpose(logits_pad.reshape(S, B, O_pad), (1, 0, 2))
    logits = logits.reshape(B * S, O_pad)[:, :O]
    hidden = h_final[None, :, :]
    return logits, hidden


def char_rnn_reference(tokens, h0, params):
    """Pure-JAX reference matching PyTorch nn.Embedding + nn.RNN(batch_first) + nn.Linear."""
    B, S = tokens.shape
    emb = jnp.take(params["embedding"], tokens, axis=0)          # (B, S, H)
    xs = jnp.transpose(emb, (1, 0, 2))                            # (S, B, H)

    def step(h, x_t):
        h = jnp.tanh(x_t @ params["w_ih"].T + params["b_ih"]
                     + h @ params["w_hh"].T + params["b_hh"])
        return h, h

    h_last, hs = jax.lax.scan(step, h0[0], xs)                    # hs: (S, B, H)
    out = jnp.transpose(hs, (1, 0, 2)).reshape(B * S, -1)
    logits = out @ params["w_fc"].T + params["b_fc"]
    return logits, h_last[None, :, :]


def init_params(key, input_size, hidden_size, output_size):
    ks = jax.random.split(key, 7)
    k = 1.0 / jnp.sqrt(hidden_size)
    u = lambda kk, shape, bound: jax.random.uniform(kk, shape, jnp.float32, -bound, bound)
    return {
        "embedding": jax.random.normal(ks[0], (input_size, hidden_size), jnp.float32),
        "w_ih": u(ks[1], (hidden_size, hidden_size), k),
        "w_hh": u(ks[2], (hidden_size, hidden_size), k),
        "b_ih": u(ks[3], (hidden_size,), k),
        "b_hh": u(ks[4], (hidden_size,), k),
        "w_fc": u(ks[5], (output_size, hidden_size), k),
        "b_fc": u(ks[6], (output_size,), k),
    }


if __name__ == "__main__":
    # TODO(synk): nn.RNN dropout only applies between stacked layers; with n_layers=1 it is a no-op.
    input_size = 16    # vocab
    hidden_size = 32
    output_size = 16
    batch = 2
    seq = 8

    key = jax.random.PRNGKey(0)
    pkey, tkey = jax.random.split(key)
    params = init_params(pkey, input_size, hidden_size, output_size)

    tokens = jax.random.randint(tkey, (batch, seq), 0, input_size, dtype=jnp.int32)
    h0 = jnp.zeros((1, batch, hidden_size), jnp.float32)  # init_hidden

    logits, hidden = char_rnn_forward(tokens, h0, params)
    jax.block_until_ready((logits, hidden))

    assert logits.shape == (batch * seq, output_size)
    assert hidden.shape == (1, batch, hidden_size)

    ref_logits, ref_hidden = char_rnn_reference(tokens, h0, params)
    assert jnp.allclose(logits, ref_logits, atol=5e-3, rtol=5e-3)
    assert jnp.allclose(hidden, ref_hidden, atol=5e-3, rtol=5e-3)

    print("KERNEL_OK")
</pallas_src>

<mosaic_0001>
module attributes {stable_mosaic.version = 11 : i64} {
  func.func @charrnn_kernel(%arg0: i32, %arg1: memref<16x32xf32, #tpu.memory_space<vmem>>, %arg2: memref<2x32xf32, #tpu.memory_space<vmem>>, %arg3: memref<32x32xf32, #tpu.memory_space<vmem>>, %arg4: memref<32x32xf32, #tpu.memory_space<vmem>>, %arg5: memref<1x32xf32, #tpu.memory_space<vmem>>, %arg6: memref<32x128xf32, #tpu.memory_space<vmem>>, %arg7: memref<1x128xf32, #tpu.memory_space<vmem>>, %arg8: memref<16x128xf32, #tpu.memory_space<vmem>>, %arg9: memref<2x32xf32, #tpu.memory_space<vmem>>, %arg10: memref<16x32xf32, #tpu.memory_space<vmem>>, %arg11: memref<16x32xf32, #tpu.memory_space<vmem>>) attributes {dimension_semantics = [#tpu.dimension_semantics<arbitrary>], iteration_bounds = array<i64: 1>, scalar_prefetch = 0 : i64, scratch_operands = 2 : i64, tpu.core_type = #tpu.core_type<tc>, window_params = [{pipeline_mode = #tpu.pipeline_mode<synchronous>, transform_indices = @transform_0, window_bounds = array<i64: 16, 32>}, {pipeline_mode = #tpu.pipeline_mode<synchronous>, transform_indices = @transform_1, window_bounds = array<i64: 2, 32>}, {pipeline_mode = #tpu.pipeline_mode<synchronous>, transform_indices = @transform_2, window_bounds = array<i64: 32, 32>}, {pipeline_mode = #tpu.pipeline_mode<synchronous>, transform_indices = @transform_3, window_bounds = array<i64: 32, 32>}, {pipeline_mode = #tpu.pipeline_mode<synchronous>, transform_indices = @transform_4, window_bounds = array<i64: 1, 32>}, {pipeline_mode = #tpu.pipeline_mode<synchronous>, transform_indices = @transform_5, window_bounds = array<i64: 32, 128>}, {pipeline_mode = #tpu.pipeline_mode<synchronous>, transform_indices = @transform_6, window_bounds = array<i64: 1, 128>}, {pipeline_mode = #tpu.pipeline_mode<synchronous>, transform_indices = @transform_7, window_bounds = array<i64: 16, 128>}, {pipeline_mode = #tpu.pipeline_mode<synchronous>, transform_indices = @transform_8, window_bounds = array<i64: 2, 32>}]} {
    %c0 = arith.constant 0 : index
    %c0_0 = arith.constant 0 : index
    %0 = vector.load %arg1[%c0, %c0_0] : memref<16x32xf32, #tpu.memory_space<vmem>>, vector<16x32xf32>
    %c0_1 = arith.constant 0 : index
    %c0_2 = arith.constant 0 : index
    %1 = vector.load %arg3[%c0_1, %c0_2] : memref<32x32xf32, #tpu.memory_space<vmem>>, vector<32x32xf32>
    %cst = arith.constant dense<0.000000e+00> : vector<16x32xf32>
    %2 = tpu.matmul %0, %1, %cst {dimension_numbers = #tpu.dot_dimension_numbers<[1], [0], [0], [1], [0, 0, 1, 1], [], []>} : vector<16x32xf32>, vector<32x32xf32>, vector<16x32xf32> -> vector<16x32xf32>
    %c0_3 = arith.constant 0 : index
    %c0_4 = arith.constant 0 : index
    %3 = vector.load %arg5[%c0_3, %c0_4] : memref<1x32xf32, #tpu.memory_space<vmem>>, vector<1x32xf32>
    %4 = vector.broadcast %3 : vector<1x32xf32> to vector<16x32xf32>
    %5 = arith.addf %2, %4 : vector<16x32xf32>
    %c0_5 = arith.constant 0 : index
    %c0_6 = arith.constant 0 : index
    %6 = vector.load %arg10[%c0_5, %c0_6] : memref<16x32xf32, #tpu.memory_space<vmem>>, vector<16x32xf32>
    tpu.vector_store %arg10[%c0_5, %c0_6], %5 {strides = array<i32>} : memref<16x32xf32, #tpu.memory_space<vmem>>, vector<16x32xf32>,
    %c0_7 = arith.constant 0 : index
    %c0_8 = arith.constant 0 : index
    %7 = vector.load %arg4[%c0_7, %c0_8] : memref<32x32xf32, #tpu.memory_space<vmem>>, vector<32x32xf32>
    %c0_9 = arith.constant 0 : index
    %c0_10 = arith.constant 0 : index
    %8 = vector.load %arg2[%c0_9, %c0_10] : memref<2x32xf32, #tpu.memory_space<vmem>>, vector<2x32xf32>
    %c0_i32 = arith.constant 0 : i32
    %c2_i32 = arith.constant 2 : i32
    %9 = arith.muli %c0_i32, %c2_i32 : i32
    %10 = arith.index_cast %9 : i32 to index
    %c0_11 = arith.constant 0 : index
    %11 = vector.load %arg10[%10, %c0_11] : memref<16x32xf32, #tpu.memory_space<vmem>>, vector<2x32xf32>
    %cst_12 = arith.constant dense<0.000000e+00> : vector<2x32xf32>
    %12 = tpu.matmul %8, %7, %cst_12 {dimension_numbers = #tpu.dot_dimension_numbers<[1], [0], [0], [1], [0, 0, 1, 1], [], []>} : vector<2x32xf32>, vector<32x32xf32>, vector<2x32xf32> -> vector<2x32xf32>
    %13 = arith.addf %11, %12 : vector<2x32xf32>
    %14 = math.tanh %13 : vector<2x32xf32>
    %15 = arith.index_cast %9 : i32 to index
    %c0_13 = arith.constant 0 : index
    %16 = vector.load %arg11[%15, %c0_13] : memref<16x32xf32, #tpu.memory_space<vmem>>, vector<2x32xf32>
    tpu.vector_store %arg11[%15, %c0_13], %14 {strides = array<i32>} : memref<16x32xf32, #tpu.memory_space<vmem>>, vector<2x32xf32>,
    %c1_i32 = arith.constant 1 : i32
    %c2_i32_14 = arith.constant 2 : i32
    %17 = arith.muli %c1_i32, %c2_i32_14 : i32
    %18 = arith.index_cast %17 : i32 to index
    %c0_15 = arith.constant 0 : index
    %19 = vector.load %arg10[%18, %c0_15] : memref<16x32xf32, #tpu.memory_space<vmem>>, vector<2x32xf32>
    %cst_16 = arith.constant dense<0.000000e+00> : vector<2x32xf32>
    %20 = tpu.matmul %14, %7, %cst_16 {dimension_numbers = #tpu.dot_dimension_numbers<[1], [0], [0], [1], [0, 0, 1, 1], [], []>} : vector<2x32xf32>, vector<32x32xf32>, vector<2x32xf32> -> vector<2x32xf32>
    %21 = arith.addf %19, %20 : vector<2x32xf32>
    %22 = math.tanh %21 : vector<2x32xf32>
    %23 = arith.index_cast %17 : i32 to index
    %c0_17 = arith.constant 0 : index
    %24 = vector.load %arg11[%23, %c0_17] : memref<16x32xf32, #tpu.memory_space<vmem>>, vector<2x32xf32>
    tpu.vector_store %arg11[%23, %c0_17], %22 {strides = array<i32>} : memref<16x32xf32, #tpu.memory_space<vmem>>, vector<2x32xf32>,
    %c2_i32_18 = arith.constant 2 : i32
    %c2_i32_19 = arith.constant 2 : i32
    %25 = arith.muli %c2_i32_18, %c2_i32_19 : i32
    %26 = arith.index_cast %25 : i32 to index
    %c0_20 = arith.constant 0 : index
    %27 = vector.load %arg10[%26, %c0_20] : memref<16x32xf32, #tpu.memory_space<vmem>>, vector<2x32xf32>
    %cst_21 = arith.constant dense<0.000000e+00> : vector<2x32xf32>
    %28 = tpu.matmul %22, %7, %cst_21 {dimension_numbers = #tpu.dot_dimension_numbers<[1], [0], [0], [1], [0, 0, 1, 1], [], []>} : vector<2x32xf32>, vector<32x32xf32>, vector<2x32xf32> -> vector<2x32xf32>
    %29 = arith.addf %27, %28 : vector<2x32xf32>
    %30 = math.tanh %29 : vector<2x32xf32>
    %31 = arith.index_cast %25 : i32 to index
    %c0_22 = arith.constant 0 : index
    %32 = vector.load %arg11[%31, %c0_22] : memref<16x32xf32, #tpu.memory_space<vmem>>, vector<2x32xf32>
    tpu.vector_store %arg11[%31, %c0_22], %30 {strides = array<i32>} : memref<16x32xf32, #tpu.memory_space<vmem>>, vector<2x32xf32>,
    %c3_i32 = arith.constant 3 : i32
    %c2_i32_23 = arith.constant 2 : i32
    %33 = arith.muli %c3_i32, %c2_i32_23 : i32
    %34 = arith.index_cast %33 : i32 to index
    %c0_24 = arith.constant 0 : index
    %35 = vector.load %arg10[%34, %c0_24] : memref<16x32xf32, #tpu.memory_space<vmem>>, vector<2x32xf32>
    %cst_25 = arith.constant dense<0.000000e+00> : vector<2x32xf32>
    %36 = tpu.matmul %30, %7, %cst_25 {dimension_numbers = #tpu.dot_dimension_numbers<[1], [0], [0], [1], [0, 0, 1, 1], [], []>} : vector<2x32xf32>, vector<32x32xf32>, vector<2x32xf32> -> vector<2x32xf32>
    %37 = arith.addf %35, %36 : vector<2x32xf32>
    %38 = math.tanh %37 : vector<2x32xf32>
    %39 = arith.index_cast %33 : i32 to index
    %c0_26 = arith.constant 0 : index
    %40 = vector.load %arg11[%39, %c0_26] : memref<16x32xf32, #tpu.memory_space<vmem>>, vector<2x32xf32>
    tpu.vector_store %arg11[%39, %c0_26], %38 {strides = array<i32>} : memref<16x32xf32, #tpu.memory_space<vmem>>, vector<2x32xf32>,
    %c4_i32 = arith.constant 4 : i32
    %c2_i32_27 = arith.constant 2 : i32
    %41 = arith.muli %c4_i32, %c2_i32_27 : i32
    %42 = arith.index_cast %41 : i32 to index
    %c0_28 = arith.constant 0 : index
    %43 = vector.load %arg10[%42, %c0_28] : memref<16x32xf32, #tpu.memory_space<vmem>>, vector<2x32xf32>
    %cst_29 = arith.constant dense<0.000000e+00> : vector<2x32xf32>
    %44 = tpu.matmul %38, %7, %cst_29 {dimension_numbers = #tpu.dot_dimension_numbers<[1], [0], [0], [1], [0, 0, 1, 1], [], []>} : vector<2x32xf32>, vector<32x32xf32>, vector<2x32xf32> -> vector<2x32xf32>
    %45 = arith.addf %43, %44 : vector<2x32xf32>
    %46 = math.tanh %45 : vector<2x32xf32>
    %47 = arith.index_cast %41 : i32 to index
    %c0_30 = arith.constant 0 : index
    %48 = vector.load %arg11[%47, %c0_30] : memref<16x32xf32, #tpu.memory_space<vmem>>, vector<2x32xf32>
    tpu.vector_store %arg11[%47, %c0_30], %46 {strides = array<i32>} : memref<16x32xf32, #tpu.memory_space<vmem>>, vector<2x32xf32>,
    %c5_i32 = arith.constant 5 : i32
    %c2_i32_31 = arith.constant 2 : i32
    %49 = arith.muli %c5_i32, %c2_i32_31 : i32
    %50 = arith.index_cast %49 : i32 to index
    %c0_32 = arith.constant 0 : index
    %51 = vector.load %arg10[%50, %c0_32] : memref<16x32xf32, #tpu.memory_space<vmem>>, vector<2x32xf32>
    %cst_33 = arith.constant dense<0.000000e+00> : vector<2x32xf32>
    %52 = tpu.matmul %46, %7, %cst_33 {dimension_numbers = #tpu.dot_dimension_numbers<[1], [0], [0], [1], [0, 0, 1, 1], [], []>} : vector<2x32xf32>, vector<32x32xf32>, vector<2x32xf32> -> vector<2x32xf32>
    %53 = arith.addf %51, %52 : vector<2x32xf32>
    %54 = math.tanh %53 : vector<2x32xf32>
    %55 = arith.index_cast %49 : i32 to index
    %c0_34 = arith.constant 0 : index
    %56 = vector.load %arg11[%55, %c0_34] : memref<16x32xf32, #tpu.memory_space<vmem>>, vector<2x32xf32>
    tpu.vector_store %arg11[%55, %c0_34], %54 {strides = array<i32>} : memref<16x32xf32, #tpu.memory_space<vmem>>, vector<2x32xf32>,
    %c6_i32 = arith.constant 6 : i32
    %c2_i32_35 = arith.constant 2 : i32
    %57 = arith.muli %c6_i32, %c2_i32_35 : i32
    %58 = arith.index_cast %57 : i32 to index
    %c0_36 = arith.constant 0 : index
    %59 = vector.load %arg10[%58, %c0_36] : memref<16x32xf32, #tpu.memory_space<vmem>>, vector<2x32xf32>
    %cst_37 = arith.constant dense<0.000000e+00> : vector<2x32xf32>
    %60 = tpu.matmul %54, %7, %cst_37 {dimension_numbers = #tpu.dot_dimension_numbers<[1], [0], [0], [1], [0, 0, 1, 1], [], []>} : vector<2x32xf32>, vector<32x32xf32>, vector<2x32xf32> -> vector<2x32xf32>
    %61 = arith.addf %59, %60 : vector<2x32xf32>
    %62 = math.tanh %61 : vector<2x32xf32>
    %63 = arith.index_cast %57 : i32 to index
    %c0_38 = arith.constant 0 : index
    %64 = vector.load %arg11[%63, %c0_38] : memref<16x32xf32, #tpu.memory_space<vmem>>, vector<2x32xf32>
    tpu.vector_store %arg11[%63, %c0_38], %62 {strides = array<i32>} : memref<16x32xf32, #tpu.memory_space<vmem>>, vector<2x32xf32>,
    %c7_i32 = arith.constant 7 : i32
    %c2_i32_39 = arith.constant 2 : i32
    %65 = arith.muli %c7_i32, %c2_i32_39 : i32
    %66 = arith.index_cast %65 : i32 to index
    %c0_40 = arith.constant 0 : index
    %67 = vector.load %arg10[%66, %c0_40] : memref<16x32xf32, #tpu.memory_space<vmem>>, vector<2x32xf32>
    %cst_41 = arith.constant dense<0.000000e+00> : vector<2x32xf32>
    %68 = tpu.matmul %62, %7, %cst_41 {dimension_numbers = #tpu.dot_dimension_numbers<[1], [0], [0], [1], [0, 0, 1, 1], [], []>} : vector<2x32xf32>, vector<32x32xf32>, vector<2x32xf32> -> vector<2x32xf32>
    %69 = arith.addf %67, %68 : vector<2x32xf32>
    %70 = math.tanh %69 : vector<2x32xf32>
    %71 = arith.index_cast %65 : i32 to index
    %c0_42 = arith.constant 0 : index
    %72 = vector.load %arg11[%71, %c0_42] : memref<16x32xf32, #tpu.memory_space<vmem>>, vector<2x32xf32>
    tpu.vector_store %arg11[%71, %c0_42], %70 {strides = array<i32>} : memref<16x32xf32, #tpu.memory_space<vmem>>, vector<2x32xf32>,
    %c8_i32 = arith.constant 8 : i32
    %c0_43 = arith.constant 0 : index
    %c0_44 = arith.constant 0 : index
    %73 = vector.load %arg11[%c0_43, %c0_44] : memref<16x32xf32, #tpu.memory_space<vmem>>, vector<16x32xf32>
    %c0_45 = arith.constant 0 : index
    %c0_46 = arith.constant 0 : index
    %74 = vector.load %arg6[%c0_45, %c0_46] : memref<32x128xf32, #tpu.memory_space<vmem>>, vector<32x128xf32>
    %cst_47 = arith.constant dense<0.000000e+00> : vector<16x128xf32>
    %75 = tpu.matmul %73, %74, %cst_47 {dimension_numbers = #tpu.dot_dimension_numbers<[1], [0], [0], [1], [0, 0, 1, 1], [], []>} : vector<16x32xf32>, vector<32x128xf32>, vector<16x128xf32> -> vector<16x128xf32>
    %c0_48 = arith.constant 0 : index
    %c0_49 = arith.constant 0 : index
    %76 = vector.load %arg7[%c0_48, %c0_49] : memref<1x128xf32, #tpu.memory_space<vmem>>, vector<1x128xf32>
    %77 = vector.broadcast %76 : vector<1x128xf32> to vector<16x128xf32>
    %78 = arith.addf %75, %77 : vector<16x128xf32>
    %c0_50 = arith.constant 0 : index
    %c0_51 = arith.constant 0 : index
    %79 = vector.load %arg8[%c0_50, %c0_51] : memref<16x128xf32, #tpu.memory_space<vmem>>, vector<16x128xf32>
    tpu.vector_store %arg8[%c0_50, %c0_51], %78 {strides = array<i32>} : memref<16x128xf32, #tpu.memory_space<vmem>>, vector<16x128xf32>,
    %c0_52 = arith.constant 0 : index
    %c0_53 = arith.constant 0 : index
    %80 = vector.load %arg9[%c0_52, %c0_53] : memref<2x32xf32, #tpu.memory_space<vmem>>, vector<2x32xf32>
    tpu.vector_store %arg9[%c0_52, %c0_53], %70 {strides = array<i32>} : memref<2x32xf32, #tpu.memory_space<vmem>>, vector<2x32xf32>,
    return
  }
  func.func @transform_0(%arg0: i32) -> (i32, i32) {
    %c0_i32 = arith.constant 0 : i32
    %c0_i32_0 = arith.constant 0 : i32
    %c0_i32_1 = arith.constant 0 : i32
    return %c0_i32, %c0_i32_0 : i32, i32
  }
  func.func @transform_1(%arg0: i32) -> (i32, i32) {
    %c0_i32 = arith.constant 0 : i32
    %c0_i32_0 = arith.constant 0 : i32
    %c0_i32_1 = arith.constant 0 : i32
    return %c0_i32, %c0_i32_0 : i32, i32
  }
  func.func @transform_2(%arg0: i32) -> (i32, i32) {
    %c0_i32 = arith.constant 0 : i32
    %c0_i32_0 = arith.constant 0 : i32
    %c0_i32_1 = arith.constant 0 : i32
    return %c0_i32, %c0_i32_0 : i32, i32
  }
  func.func @transform_3(%arg0: i32) -> (i32, i32) {
    %c0_i32 = arith.constant 0 : i32
    %c0_i32_0 = arith.constant 0 : i32
    %c0_i32_1 = arith.constant 0 : i32
    return %c0_i32, %c0_i32_0 : i32, i32
  }
  func.func @transform_4(%arg0: i32) -> (i32, i32) {
    %c0_i32 = arith.constant 0 : i32
    %c0_i32_0 = arith.constant 0 : i32
    %c0_i32_1 = arith.constant 0 : i32
    return %c0_i32, %c0_i32_0 : i32, i32
  }
  func.func @transform_5(%arg0: i32) -> (i32, i32) {
    %c0_i32 = arith.constant 0 : i32
    %c0_i32_0 = arith.constant 0 : i32
    %c0_i32_1 = arith.constant 0 : i32
    return %c0_i32, %c0_i32_0 : i32, i32
  }
  func.func @transform_6(%arg0: i32) -> (i32, i32) {
    %c0_i32 = arith.constant 0 : i32
    %c0_i32_0 = arith.constant 0 : i32
    %c0_i32_1 = arith.constant 0 : i32
    return %c0_i32, %c0_i32_0 : i32, i32
  }
  func.func @transform_7(%arg0: i32) -> (i32, i32) {
    %c0_i32 = arith.constant 0 : i32
    %c0_i32_0 = arith.constant 0 : i32
    %c0_i32_1 = arith.constant 0 : i32
    return %c0_i32, %c0_i32_0 : i32, i32
  }
  func.func @transform_8(%arg0: i32) -> (i32, i32) {
    %c0_i32 = arith.constant 0 : i32
    %c0_i32_0 = arith.constant 0 : i32
    %c0_i32_1 = arith.constant 0 : i32
    return %c0_i32, %c0_i32_0 : i32, i32
  }
}

</mosaic_0001>

<llo_original>
// kernel: tpu_custom_call.1
$region0: #{tpu_custom_call.1}
  #allocation0 [shape = 'u32[]', space=smem, size = 0x4, offset = 0x4, fixed_abs, tag = 'smem constant byte address 0x4 - core index']
  #allocation1 [shape = 'u32[144,128]{1,0:T(1,128)}', space=vmem, size = 0x12000, scoped, tag = 'internal scratch']
  #allocation2 [shape = 'f32[16,32]{1,0:T(8,128)}', space=vmem, size = 0x2000, scoped, tag = 'scratch operand']
  #allocation3 [shape = 'f32[16,32]{1,0:T(8,128)}', space=vmem, size = 0x2000, scoped, tag = 'scratch operand']
  %s0 = inlined_call_operand.hbm [shape: f32[16,32], index: 0, kind: input, shape index: {}]
  %s1 = inlined_call_operand.vmem [shape: f32[2,32], index: 1, kind: input, shape index: {}]
  %s2 = inlined_call_operand.hbm [shape: f32[32,32], index: 2, kind: input, shape index: {}]
  %s3 = inlined_call_operand.hbm [shape: f32[32,32], index: 3, kind: input, shape index: {}]
  %s4 = inlined_call_operand.vmem [shape: f32[1,32], index: 4, kind: input, shape index: {}]
  %s5 = inlined_call_operand.hbm [shape: f32[32,128], index: 5, kind: input, shape index: {}]
  %s6 = inlined_call_operand.vmem [shape: f32[1,128], index: 6, kind: input, shape index: {}]
  %s7 = inlined_call_operand.hbm [shape: f32[16,128], index: 7, kind: output, shape index: {0}]
  %s8 = inlined_call_operand.hbm [shape: f32[2,32], index: 8, kind: output, shape index: {1}]
  %9 = xla_tuple %s7, %s8
  %s10 = sld [smem:[#allocation0]]
  $region62: #{tpu_custom_call.1} parent=0
    _
  %s12 = ssub.s32 1, %s10
  %s13 = scalar_select 0, %s12, %s10
  $region1: #{tpu_custom_call.1} parent=0
    #allocation4 [shape = 'u8[8192]{0}', space=vmem, size = 0x2000, scoped, tag = 'input window, operand 0, single buffered']
    #allocation5 [shape = 's32[1]{0}', space=sflag, size = 0x4, scoped, tag = 'scoped memory for tpu_custom_call.1']
    #allocation6 [shape = 's32[1]{0}', space=sflag, size = 0x4, scoped, tag = 'scoped memory for tpu_custom_call.1']
    #allocation7 [shape = 'u8[16384]{0}', space=vmem, size = 0x4000, scoped, tag = 'input window, operand 2, single buffered']
    #allocation8 [shape = 's32[1]{0}', space=sflag, size = 0x4, scoped, tag = 'scoped memory for tpu_custom_call.1']
    #allocation9 [shape = 'u8[16384]{0}', space=vmem, size = 0x4000, scoped, tag = 'input window, operand 3, single buffered']
    #allocation10 [shape = 'u8[16384]{0}', space=vmem, size = 0x4000, scoped, tag = 'input window, operand 5, single buffered']
    #allocation11 [shape = 's32[1]{0}', space=sflag, size = 0x4, scoped, tag = 'scoped memory for tpu_custom_call.1']
    #allocation12 [shape = 'u8[8192]{0}', space=vmem, size = 0x2000, scoped, tag = 'output window, operand 0, single buffered']
    #allocation13 [shape = 'u8[1024]{0}', space=vmem, size = 0x400, scoped, tag = 'output window, operand 1, single buffered']
    #allocation14 [shape = 's32[1]{0}', space=sflag, size = 0x4, scoped, tag = 'scoped memory for tpu_custom_call.1']
    %14 = vsyncpa [#allocation5], 0
    %15 = vsyncpa [#allocation8], 0
    %16 = vsyncpa [#allocation11], 0
    %17 = vsyncpa [#allocation6], 0
    %18 = vsyncpa [#allocation14], 0
    // Predicated region
    $region2: #{tpu_custom_call.1} parent=1 // pred_check
      _
    $region3: #{tpu_custom_call.1} parent=1 // pred_check_branch
      %20 = sbr.rel (0) target = $region5
    $region4: #{tpu_custom_call.1} parent=1 // pred_region
      %s22 = ssub.s32 256, 256
      %23 = vsyncadd [#allocation5], %s22
      %s24 = sshll.u32 [#allocation4], 4
      %s25 = int_to_ptr.vmem [resolvable:$true] %s24
      %30 = dma.hbm_to_vmem [thread:$0]  %s0, 256, %s25, [#allocation5], 128, 128, 8
    $region5: #{tpu_custom_call.1} parent=1 // pred_fallthru
      _
    // Predicated region
    $region6: #{tpu_custom_call.1} parent=1 // pred_check
      _
    $region7: #{tpu_custom_call.1} parent=1 // pred_check_branch
      %32 = sbr.rel (0) target = $region9
    $region8: #{tpu_custom_call.1} parent=1 // pred_region
      _
    $region9: #{tpu_custom_call.1} parent=1 // pred_fallthru
      _
    // Predicated region
    $region10: #{tpu_custom_call.1} parent=1 // pred_check
      _
    $region11: #{tpu_custom_call.1} parent=1 // pred_check_branch
      %34 = sbr.rel (0) target = $region13
    $region12: #{tpu_custom_call.1} parent=1 // pred_region
      %s36 = ssub.s32 512, 512
      %37 = vsyncadd [#allocation8], %s36
      %s38 = sshll.u32 [#allocation7], 4
      %s39 = int_to_ptr.vmem [resolvable:$true] %s38
      %44 = dma.hbm_to_vmem [thread:$0]  %s2, 512, %s39, [#allocation8], 128, 128, 8
    $region13: #{tpu_custom_call.1} parent=1 // pred_fallthru
      _
    // Predicated region
    $region14: #{tpu_custom_call.1} parent=1 // pred_check
      _
    $region15: #{tpu_custom_call.1} parent=1 // pred_check_branch
      %46 = sbr.rel (0) target = $region17
    $region16: #{tpu_custom_call.1} parent=1 // pred_region
      %s48 = ssub.s32 512, 512
      %49 = vsyncadd [#allocation8], %s48
      %s50 = sshll.u32 [#allocation9], 4
      %s51 = int_to_ptr.vmem [resolvable:$true] %s50
      %56 = dma.hbm_to_vmem [thread:$0]  %s3, 512, %s51, [#allocation8], 128, 128, 8
    $region17: #{tpu_custom_call.1} parent=1 // pred_fallthru
      _
    // Predicated region
    $region18: #{tpu_custom_call.1} parent=1 // pred_check
      _
    $region19: #{tpu_custom_call.1} parent=1 // pred_check_branch
      %58 = sbr.rel (0) target = $region21
    $region20: #{tpu_custom_call.1} parent=1 // pred_region
      _
    $region21: #{tpu_custom_call.1} parent=1 // pred_fallthru
      _
    // Predicated region
    $region22: #{tpu_custom_call.1} parent=1 // pred_check
      _
    $region23: #{tpu_custom_call.1} parent=1 // pred_check_branch
      %60 = sbr.rel (0) target = $region25
    $region24: #{tpu_custom_call.1} parent=1 // pred_region
      %s62 = ssub.s32 512, 512
      %63 = vsyncadd [#allocation11], %s62
      %s64 = sshll.u32 [#allocation10], 4
      %s65 = int_to_ptr.vmem [resolvable:$true] %s64
      %70 = dma.hbm_to_vmem [thread:$0]  %s5, 512, %s65, [#allocation11], 128, 128, 8
    $region25: #{tpu_custom_call.1} parent=1 // pred_fallthru
      _
    // Predicated region
    $region26: #{tpu_custom_call.1} parent=1 // pred_check
      _
    $region27: #{tpu_custom_call.1} parent=1 // pred_check_branch
      %72 = sbr.rel (0) target = $region29
    $region28: #{tpu_custom_call.1} parent=1 // pred_region
      _
    $region29: #{tpu_custom_call.1} parent=1 // pred_fallthru
      _
    // Predicated region
    $region30: #{tpu_custom_call.1} parent=1 // pred_check
      _
    $region31: #{tpu_custom_call.1} parent=1 // pred_check_branch
      %74 = sbr.rel (0) target = $region33
    $region32: #{tpu_custom_call.1} parent=1 // pred_region
      %75 = dma.done [#allocation5], 256
    $region33: #{tpu_custom_call.1} parent=1 // pred_fallthru
      _
    // Predicated region
    $region34: #{tpu_custom_call.1} parent=1 // pred_check
      _
    $region35: #{tpu_custom_call.1} parent=1 // pred_check_branch
      %77 = sbr.rel (0) target = $region37
    $region36: #{tpu_custom_call.1} parent=1 // pred_region
      %78 = dma.done [#allocation8], 512
    $region37: #{tpu_custom_call.1} parent=1 // pred_fallthru
      _
    // Predicated region
    $region38: #{tpu_custom_call.1} parent=1 // pred_check
      _
    $region39: #{tpu_custom_call.1} parent=1 // pred_check_branch
      %80 = sbr.rel (0) target = $region41
    $region40: #{tpu_custom_call.1} parent=1 // pred_region
      %81 = dma.done [#allocation8], 512
    $region41: #{tpu_custom_call.1} parent=1 // pred_fallthru
      _
    // Predicated region
    $region42: #{tpu_custom_call.1} parent=1 // pred_check
      _
    $region43: #{tpu_custom_call.1} parent=1 // pred_check_branch
      %83 = sbr.rel (0) target = $region45
    $region44: #{tpu_custom_call.1} parent=1 // pred_region
      %84 = dma.done [#allocation11], 512
    $region45: #{tpu_custom_call.1} parent=1 // pred_fallthru
      _
    %v85 = vld [vmem:[#allocation4] sm:$0xff]
    %v86 = vld [vmem:[#allocation4 + $0x8] sm:$0xff]
    %v87 = vld [vmem:[#allocation7] sm:$0xff]
    %v88 = vld [vmem:[#allocation7 + $0x8] sm:$0xff]
    %v89 = vld [vmem:[#allocation7 + $0x10] sm:$0xff]
    %v90 = vld [vmem:[#allocation7 + $0x18] sm:$0xff]
    %v91 = vld [vmem:[%s4] sm:$0x1]
    %v93 = vlaneseq
    %v94 = vshrl.u32 %v93, 7
    %v95 = vsub.s32 0, %v94
    %v96 = vrot.slane %v91, %v95
    %vm98 = vcmask 261120
    %v100 = vsel %vm98, %v85, 0
    %v103 = vsel %vm98, %v86, 0
    %105 = vmatprep.subr.mxu0 0.0
    %106 = vmatpush1.msra.mxu0 %v87
    %107 = vmatprep.subr.mxu0 0.0
    %108 = vmatpush1.msra.mxu0 %v88
    %109 = vmatprep.subr.mxu0 0.0
    %110 = vmatpush1.msra.mxu0 %v89
    %111 = vmatprep.subr.mxu0 0.0
    %112 = vmatpush1.msra.mxu0 %v90
    %113 = vmatprep.subr.mxu0 0.0
    %114 = vmatpush1.msra.mxu0 0.0
    %115 = vmatprep.subr.mxu0 0.0
    %116 = vmatpush1.msra.mxu0 0.0
    %117 = vmatprep.subr.mxu0 0.0
    %118 = vmatpush1.msra.mxu0 0.0
    %119 = vmatprep.subr.mxu0 0.0
    %120 = vmatpush1.msra.mxu0 0.0
    %121 = vmatprep.subr.mxu0 0.0
    %122 = vmatpush1.msra.mxu0 0.0
    %123 = vmatprep.subr.mxu0 0.0
    %124 = vmatpush1.msra.mxu0 0.0
    %125 = vmatprep.subr.mxu0 0.0
    %126 = vmatpush1.msra.mxu0 0.0
    %127 = vmatprep.subr.mxu0 0.0
    %128 = vmatpush1.msra.mxu0 0.0
    %129 = vmatprep.subr.mxu0 0.0
    %130 = vmatpush1.msra.mxu0 0.0
    %131 = vmatprep.subr.mxu0 0.0
    %132 = vmatpush1.msra.mxu0 0.0
    %133 = vmatprep.subr.mxu0 0.0
    %134 = vmatpush1.msra.mxu0 0.0
    %135 = vmatprep.subr.mxu0 0.0
    %136 = vmatpush1.msra.mxu0 0.0
    %137 = vmatprep.subr.mxu0 0.0
    %138 = vmatpush1.msra.mxu0 0.0
    %139 = vmatprep.subr.mxu0 0.0
    %140 = vmatpush1.msra.mxu0 0.0
    %141 = vmatprep.subr.mxu0 0.0
    %142 = vmatpush1.msra.mxu0 0.0
    %143 = vmatprep.subr.mxu0 0.0
    %144 = vmatpush1.msra.mxu0 0.0
    %145 = vmatprep.subr.mxu0 0.0
    %146 = vmatpush1.msra.mxu0 0.0
    %147 = vmatprep.subr.mxu0 0.0
    %148 = vmatpush1.msra.mxu0 0.0
    %149 = vmatprep.subr.mxu0 0.0
    %150 = vmatpush1.msra.mxu0 0.0
    %151 = vmatprep.subr.mxu0 0.0
    %152 = vmatpush1.msra.mxu0 0.0
    %153 = vmatprep.subr.mxu0 0.0
    %154 = vmatpush1.msra.mxu0 0.0
    %155 = vmatprep.subr.mxu0 0.0
    %156 = vmatpush1.msra.mxu0 0.0
    %157 = vmatprep.subr.mxu0 0.0
    %158 = vmatpush1.msra.mxu0 0.0
    %159 = vmatprep.subr.mxu0 0.0
    %160 = vmatpush1.msra.mxu0 0.0
    %161 = vmatprep.subr.mxu0 0.0
    %162 = vmatpush1.msra.mxu0 0.0
    %163 = vmatprep.subr.mxu0 0.0
    %164 = vmatpush1.msra.mxu0 0.0
    %165 = vmatprep.subr.mxu0 0.0
    %166 = vmatpush1.msra.mxu0 0.0
    %167 = vmatprep.subr.mxu0 0.0
    %168 = vmatpush1.msra.mxu0 0.0
    %169 = vmatprep.mubr.f32.mxu0 0.0
    %170 = vmatmul.mubr.f32.gmra.mrb[0].mxu0 %v100
    %v171 = vpop.f32.mrb[0].mxu0
    %v172 = vadd.f32 %v96, %v171
    %v173 = vpop.f32.mrb[0].mxu0
    %174 = vmatprep.mubr.f32.mxu0 0.0
    %175 = vmatmul.mubr.f32.gmra.mrb[0].mxu0 %v103
    %v176 = vpop.f32.mrb[0].mxu0
    %v177 = vadd.f32 %v96, %v176
    %v178 = vpop.f32.mrb[0].mxu0
    %179 = vdwg.mxu0
    %180 = vst.msk [vmem:[#allocation2] sm:$0xff] %vm98, %v172
    %181 = vst.msk [vmem:[#allocation2 + $0x8] sm:$0xff] %vm98, %v177
    %v182 = vld [vmem:[#allocation9] sm:$0xff]
    %v183 = vld [vmem:[#allocation9 + $0x8] sm:$0xff]
    %v184 = vld [vmem:[#allocation9 + $0x10] sm:$0xff]
    %v185 = vld [vmem:[#allocation9 + $0x18] sm:$0xff]
    %v186 = vld [vmem:[%s1] sm:$0x3]
    %v187 = vld [vmem:[#allocation2] sm:$0x3]
    %v189 = vsel %vm98, %v186, 0
    %191 = vmatprep.subr.mxu0 0.0
    %192 = vmatpush1.msra.mxu0 %v182
    %193 = vmatprep.subr.mxu0 0.0
    %194 = vmatpush1.msra.mxu0 %v183
    %195 = vmatprep.subr.mxu0 0.0
    %196 = vmatpush1.msra.mxu0 %v184
    %197 = vmatprep.subr.mxu0 0.0
    %198 = vmatpush1.msra.mxu0 %v185
    %199 = vmatprep.subr.mxu0 0.0
    %200 = vmatpush1.msra.mxu0 0.0
    %201 = vmatprep.subr.mxu0 0.0
    %202 = vmatpush1.msra.mxu0 0.0
    %203 = vmatprep.subr.mxu0 0.0
    %204 = vmatpush1.msra.mxu0 0.0
    %205 = vmatprep.subr.mxu0 0.0
    %206 = vmatpush1.msra.mxu0 0.0
    %207 = vmatprep.subr.mxu0 0.0
    %208 = vmatpush1.msra.mxu0 0.0
    %209 = vmatprep.subr.mxu0 0.0
    %210 = vmatpush1.msra.mxu0 0.0
    %211 = vmatprep.subr.mxu0 0.0
    %212 = vmatpush1.msra.mxu0 0.0
    %213 = vmatprep.subr.mxu0 0.0
    %214 = vmatpush1.msra.mxu0 0.0
    %215 = vmatprep.subr.mxu0 0.0
    %216 = vmatpush1.msra.mxu0 0.0
    %217 = vmatprep.subr.mxu0 0.0
    %218 = vmatpush1.msra.mxu0 0.0
    %219 = vmatprep.subr.mxu0 0.0
    %220 = vmatpush1.msra.mxu0 0.0
    %221 = vmatprep.subr.mxu0 0.0
    %222 = vmatpush1.msra.mxu0 0.0
    %223 = vmatprep.subr.mxu0 0.0
    %224 = vmatpush1.msra.mxu0 0.0
    %225 = vmatprep.subr.mxu0 0.0
    %226 = vmatpush1.msra.mxu0 0.0
    %227 = vmatprep.subr.mxu0 0.0
    %228 = vmatpush1.msra.mxu0 0.0
    %229 = vmatprep.subr.mxu0 0.0
    %230 = vmatpush1.msra.mxu0 0.0
    %231 = vmatprep.subr.mxu0 0.0
    %232 = vmatpush1.msra.mxu0 0.0
    %233 = vmatprep.subr.mxu0 0.0
    %234 = vmatpush1.msra.mxu0 0.0
    %235 = vmatprep.subr.mxu0 0.0
    %236 = vmatpush1.msra.mxu0 0.0
    %237 = vmatprep.subr.mxu0 0.0
    %238 = vmatpush1.msra.mxu0 0.0
    %239 = vmatprep.subr.mxu0 0.0
    %240 = vmatpush1.msra.mxu0 0.0
    %241 = vmatprep.subr.mxu0 0.0
    %242 = vmatpush1.msra.mxu0 0.0
    %243 = vmatprep.subr.mxu0 0.0
    %244 = vmatpush1.msra.mxu0 0.0
    %245 = vmatprep.subr.mxu0 0.0
    %246 = vmatpush1.msra.mxu0 0.0
    %247 = vmatprep.subr.mxu0 0.0
    %248 = vmatpush1.msra.mxu0 0.0
    %249 = vmatprep.subr.mxu0 0.0
    %250 = vmatpush1.msra.mxu0 0.0
    %251 = vmatprep.subr.mxu0 0.0
    %252 = vmatpush1.msra.mxu0 0.0
    %253 = vmatprep.subr.mxu0 0.0
    %254 = vmatpush1.msra.mxu0 0.0
    %255 = vmatprep.mubr.f32.mxu0 0.0
    %256 = vmatmul.mubr.f32.gmra.mrb[0].mxu0 %v189
    %v257 = vpop.f32.mrb[0].mxu0
    %v258 = vadd.f32 0.0, %v257
    %v259 = vpop.f32.mrb[0].mxu0
    %260 = vdwg.mxu0
    %v261 = vadd.f32 %v187, %v258
    %v262 = vtanh.pop %v261
    %vm263 = vcmask 254976
    %264 = vst.msk [vmem:[#allocation3] sm:$0x3] %vm263, %v262
    %v265 = vld [vmem:[#allocation2 + $0x2] sm:$0x3]
    %v267 = vsel %vm98, %v262, 0
    %269 = vmatprep.subr.mxu0 0.0
    %270 = vmatpush1.msra.mxu0 %v182
    %271 = vmatprep.subr.mxu0 0.0
    %272 = vmatpush1.msra.mxu0 %v183
    %273 = vmatprep.subr.mxu0 0.0
    %274 = vmatpush1.msra.mxu0 %v184
    %275 = vmatprep.subr.mxu0 0.0
    %276 = vmatpush1.msra.mxu0 %v185
    %277 = vmatprep.subr.mxu0 0.0
    %278 = vmatpush1.msra.mxu0 0.0
    %279 = vmatprep.subr.mxu0 0.0
    %280 = vmatpush1.msra.mxu0 0.0
    %281 = vmatprep.subr.mxu0 0.0
    %282 = vmatpush1.msra.mxu0 0.0
    %283 = vmatprep.subr.mxu0 0.0
    %284 = vmatpush1.msra.mxu0 0.0
    %285 = vmatprep.subr.mxu0 0.0
    %286 = vmatpush1.msra.mxu0 0.0
    %287 = vmatprep.subr.mxu0 0.0
    %288 = vmatpush1.msra.mxu0 0.0
    %289 = vmatprep.subr.mxu0 0.0
    %290 = vmatpush1.msra.mxu0 0.0
    %291 = vmatprep.subr.mxu0 0.0
    %292 = vmatpush1.msra.mxu0 0.0
    %293 = vmatprep.subr.mxu0 0.0
    %294 = vmatpush1.msra.mxu0 0.0
    %295 = vmatprep.subr.mxu0 0.0
    %296 = vmatpush1.msra.mxu0 0.0
    %297 = vmatprep.subr.mxu0 0.0
    %298 = vmatpush1.msra.mxu0 0.0
    %299 = vmatprep.subr.mxu0 0.0
    %300 = vmatpush1.msra.mxu0 0.0
    %301 = vmatprep.subr.mxu0 0.0
    %302 = vmatpush1.msra.mxu0 0.0
    %303 = vmatprep.subr.mxu0 0.0
    %304 = vmatpush1.msra.mxu0 0.0
    %305 = vmatprep.subr.mxu0 0.0
    %306 = vmatpush1.msra.mxu0 0.0
    %307 = vmatprep.subr.mxu0 0.0
    %308 = vmatpush1.msra.mxu0 0.0
    %309 = vmatprep.subr.mxu0 0.0
    %310 = vmatpush1.msra.mxu0 0.0
    %311 = vmatprep.subr.mxu0 0.0
    %312 = vmatpush1.msra.mxu0 0.0
    %313 = vmatprep.subr.mxu0 0.0
    %314 = vmatpush1.msra.mxu0 0.0
    %315 = vmatprep.subr.mxu0 0.0
    %316 = vmatpush1.msra.mxu0 0.0
    %317 = vmatprep.subr.mxu0 0.0
    %318 = vmatpush1.msra.mxu0 0.0
    %319 = vmatprep.subr.mxu0 0.0
    %320 = vmatpush1.msra.mxu0 0.0
    %321 = vmatprep.subr.mxu0 0.0
    %322 = vmatpush1.msra.mxu0 0.0
    %323 = vmatprep.subr.mxu0 0.0
    %324 = vmatpush1.msra.mxu0 0.0
    %325 = vmatprep.subr.mxu0 0.0
    %326 = vmatpush1.msra.mxu0 0.0
    %327 = vmatprep.subr.mxu0 0.0
    %328 = vmatpush1.msra.mxu0 0.0
    %329 = vmatprep.subr.mxu0 0.0
    %330 = vmatpush1.msra.mxu0 0.0
    %331 = vmatprep.subr.mxu0 0.0
    %332 = vmatpush1.msra.mxu0 0.0
    %333 = vmatprep.mubr.f32.mxu0 0.0
    %334 = vmatmul.mubr.f32.gmra.mrb[0].mxu0 %v267
    %v335 = vpop.f32.mrb[0].mxu0
    %v336 = vadd.f32 0.0, %v335
    %v337 = vpop.f32.mrb[0].mxu0
    %338 = vdwg.mxu0
    %v339 = vadd.f32 %v265, %v336
    %v340 = vtanh.pop %v339
    %341 = vst.msk [vmem:[#allocation3 + $0x2] sm:$0x3] %vm263, %v340
    %v342 = vld [vmem:[#allocation2 + $0x4] sm:$0x3]
    %v344 = vsel %vm98, %v340, 0
    %346 = vmatprep.subr.mxu0 0.0
    %347 = vmatpush1.msra.mxu0 %v182
    %348 = vmatprep.subr.mxu0 0.0
    %349 = vmatpush1.msra.mxu0 %v183
    %350 = vmatprep.subr.mxu0 0.0
    %351 = vmatpush1.msra.mxu0 %v184
    %352 = vmatprep.subr.mxu0 0.0
    %353 = vmatpush1.msra.mxu0 %v185
    %354 = vmatprep.subr.mxu0 0.0
    %355 = vmatpush1.msra.mxu0 0.0
    %356 = vmatprep.subr.mxu0 0.0
    %357 = vmatpush1.msra.mxu0 0.0
    %358 = vmatprep.subr.mxu0 0.0
    %359 = vmatpush1.msra.mxu0 0.0
    %360 = vmatprep.subr.mxu0 0.0
    %361 = vmatpush1.msra.mxu0 0.0
    %362 = vmatprep.subr.mxu0 0.0
    %363 = vmatpush1.msra.mxu0 0.0
    %364 = vmatprep.subr.mxu0 0.0
    %365 = vmatpush1.msra.mxu0 0.0
    %366 = vmatprep.subr.mxu0 0.0
    %367 = vmatpush1.msra.mxu0 0.0
    %368 = vmatprep.subr.mxu0 0.0
    %369 = vmatpush1.msra.mxu0 0.0
    %370 = vmatprep.subr.mxu0 0.0
    %371 = vmatpush1.msra.mxu0 0.0
    %372 = vmatprep.subr.mxu0 0.0
    %373 = vmatpush1.msra.mxu0 0.0
    %374 = vmatprep.subr.mxu0 0.0
    %375 = vmatpush1.msra.mxu0 0.0
    %376 = vmatprep.subr.mxu0 0.0
    %377 = vmatpush1.msra.mxu0 0.0
    %378 = vmatprep.subr.mxu0 0.0
    %379 = vmatpush1.msra.mxu0 0.0
    %380 = vmatprep.subr.mxu0 0.0
    %381 = vmatpush1.msra.mxu0 0.0
    %382 = vmatprep.subr.mxu0 0.0
    %383 = vmatpush1.msra.mxu0 0.0
    %384 = vmatprep.subr.mxu0 0.0
    %385 = vmatpush1.msra.mxu0 0.0
    %386 = vmatprep.subr.mxu0 0.0
    %387 = vmatpush1.msra.mxu0 0.0
    %388 = vmatprep.subr.mxu0 0.0
    %389 = vmatpush1.msra.mxu0 0.0
    %390 = vmatprep.subr.mxu0 0.0
    %391 = vmatpush1.msra.mxu0 0.0
    %392 = vmatprep.subr.mxu0 0.0
    %393 = vmatpush1.msra.mxu0 0.0
    %394 = vmatprep.subr.mxu0 0.0
    %395 = vmatpush1.msra.mxu0 0.0
    %396 = vmatprep.subr.mxu0 0.0
    %397 = vmatpush1.msra.mxu0 0.0
    %398 = vmatprep.subr.mxu0 0.0
    %399 = vmatpush1.msra.mxu0 0.0
    %400 = vmatprep.subr.mxu0 0.0
    %401 = vmatpush1.msra.mxu0 0.0
    %402 = vmatprep.subr.mxu0 0.0
    %403 = vmatpush1.msra.mxu0 0.0
    %404 = vmatprep.subr.mxu0 0.0
    %405 = vmatpush1.msra.mxu0 0.0
    %406 = vmatprep.subr.mxu0 0.0
    %407 = vmatpush1.msra.mxu0 0.0
    %408 = vmatprep.subr.mxu0 0.0
    %409 = vmatpush1.msra.mxu0 0.0
    %410 = vmatprep.mubr.f32.mxu0 0.0
    %411 = vmatmul.mubr.f32.gmra.mrb[0].mxu0 %v344
    %v412 = vpop.f32.mrb[0].mxu0
    %v413 = vadd.f32 0.0, %v412
    %v414 = vpop.f32.mrb[0].mxu0
    %415 = vdwg.mxu0
    %v416 = vadd.f32 %v342, %v413
    %v417 = vtanh.pop %v416
    %418 = vst.msk [vmem:[#allocation3 + $0x4] sm:$0x3] %vm263, %v417
    %v419 = vld [vmem:[#allocation2 + $0x6] sm:$0x3]
    %v421 = vsel %vm98, %v417, 0
    %423 = vmatprep.subr.mxu0 0.0
    %424 = vmatpush1.msra.mxu0 %v182
    %425 = vmatprep.subr.mxu0 0.0
    %426 = vmatpush1.msra.mxu0 %v183
    %427 = vmatprep.subr.mxu0 0.0
    %428 = vmatpush1.msra.mxu0 %v184
    %429 = vmatprep.subr.mxu0 0.0
    %430 = vmatpush1.msra.mxu0 %v185
    %431 = vmatprep.subr.mxu0 0.0
    %432 = vmatpush1.msra.mxu0 0.0
    %433 = vmatprep.subr.mxu0 0.0
    %434 = vmatpush1.msra.mxu0 0.0
    %435 = vmatprep.subr.mxu0 0.0
    %436 = vmatpush1.msra.mxu0 0.0
    %437 = vmatprep.subr.mxu0 0.0
    %438 = vmatpush1.msra.mxu0 0.0
    %439 = vmatprep.subr.mxu0 0.0
    %440 = vmatpush1.msra.mxu0 0.0
    %441 = vmatprep.subr.mxu0 0.0
    %442 = vmatpush1.msra.mxu0 0.0
    %443 = vmatprep.subr.mxu0 0.0
    %444 = vmatpush1.msra.mxu0 0.0
    %445 = vmatprep.subr.mxu0 0.0
    %446 = vmatpush1.msra.mxu0 0.0
    %447 = vmatprep.subr.mxu0 0.0
    %448 = vmatpush1.msra.mxu0 0.0
    %449 = vmatprep.subr.mxu0 0.0
    %450 = vmatpush1.msra.mxu0 0.0
    %451 = vmatprep.subr.mxu0 0.0
    %452 = vmatpush1.msra.mxu0 0.0
    %453 = vmatprep.subr.mxu0 0.0
    %454 = vmatpush1.msra.mxu0 0.0
    %455 = vmatprep.subr.mxu0 0.0
    %456 = vmatpush1.msra.mxu0 0.0
    %457 = vmatprep.subr.mxu0 0.0
    %458 = vmatpush1.msra.mxu0 0.0
    %459 = vmatprep.subr.mxu0 0.0
    %460 = vmatpush1.msra.mxu0 0.0
    %461 = vmatprep.subr.mxu0 0.0
    %462 = vmatpush1.msra.mxu0 0.0
    %463 = vmatprep.subr.mxu0 0.0
    %464 = vmatpush1.msra.mxu0 0.0
    %465 = vmatprep.subr.mxu0 0.0
    %466 = vmatpush1.msra.mxu0 0.0
    %467 = vmatprep.subr.mxu0 0.0
    %468 = vmatpush1.msra.mxu0 0.0
    %469 = vmatprep.subr.mxu0 0.0
    %470 = vmatpush1.msra.mxu0 0.0
    %471 = vmatprep.subr.mxu0 0.0
    %472 = vmatpush1.msra.mxu0 0.0
    %473 = vmatprep.subr.mxu0 0.0
    %474 = vmatpush1.msra.mxu0 0.0
    %475 = vmatprep.subr.mxu0 0.0
    %476 = vmatpush1.msra.mxu0 0.0
    %477 = vmatprep.subr.mxu0 0.0
    %478 = vmatpush1.msra.mxu0 0.0
    %479 = vmatprep.subr.mxu0 0.0
    %480 = vmatpush1.msra.mxu0 0.0
    %481 = vmatprep.subr.mxu0 0.0
    %482 = vmatpush1.msra.mxu0 0.0
    %483 = vmatprep.subr.mxu0 0.0
    %484 = vmatpush1.msra.mxu0 0.0
    %485 = vmatprep.subr.mxu0 0.0
    %486 = vmatpush1.msra.mxu0 0.0
    %487 = vmatprep.mubr.f32.mxu0 0.0
    %488 = vmatmul.mubr.f32.gmra.mrb[0].mxu0 %v421
    %v489 = vpop.f32.mrb[0].mxu0
    %v490 = vadd.f32 0.0, %v489
    %v491 = vpop.f32.mrb[0].mxu0
    %492 = vdwg.mxu0
    %v493 = vadd.f32 %v419, %v490
    %v494 = vtanh.pop %v493
    %495 = vst.msk [vmem:[#allocation3 + $0x6] sm:$0x3] %vm263, %v494
    %v496 = vld [vmem:[#allocation2 + $0x8] sm:$0x3]
    %v498 = vsel %vm98, %v494, 0
    %500 = vmatprep.subr.mxu0 0.0
    %501 = vmatpush1.msra.mxu0 %v182
    %502 = vmatprep.subr.mxu0 0.0
    %503 = vmatpush1.msra.mxu0 %v183
    %504 = vmatprep.subr.mxu0 0.0
    %505 = vmatpush1.msra.mxu0 %v184
    %506 = vmatprep.subr.mxu0 0.0
    %507 = vmatpush1.msra.mxu0 %v185
    %508 = vmatprep.subr.mxu0 0.0
    %509 = vmatpush1.msra.mxu0 0.0
    %510 = vmatprep.subr.mxu0 0.0
    %511 = vmatpush1.msra.mxu0 0.0
    %512 = vmatprep.subr.mxu0 0.0
    %513 = vmatpush1.msra.mxu0 0.0
    %514 = vmatprep.subr.mxu0 0.0
    %515 = vmatpush1.msra.mxu0 0.0
    %516 = vmatprep.subr.mxu0 0.0
    %517 = vmatpush1.msra.mxu0 0.0
    %518 = vmatprep.subr.mxu0 0.0
    %519 = vmatpush1.msra.mxu0 0.0
    %520 = vmatprep.subr.mxu0 0.0
    %521 = vmatpush1.msra.mxu0 0.0
    %522 = vmatprep.subr.mxu0 0.0
    %523 = vmatpush1.msra.mxu0 0.0
    %524 = vmatprep.subr.mxu0 0.0
    %525 = vmatpush1.msra.mxu0 0.0
    %526 = vmatprep.subr.mxu0 0.0
    %527 = vmatpush1.msra.mxu0 0.0
    %528 = vmatprep.subr.mxu0 0.0
    %529 = vmatpush1.msra.mxu0 0.0
    %530 = vmatprep.subr.mxu0 0.0
    %531 = vmatpush1.msra.mxu0 0.0
    %532 = vmatprep.subr.mxu0 0.0
    %533 = vmatpush1.msra.mxu0 0.0
    %534 = vmatprep.subr.mxu0 0.0
    %535 = vmatpush1.msra.mxu0 0.0
    %536 = vmatprep.subr.mxu0 0.0
    %537 = vmatpush1.msra.mxu0 0.0
    %538 = vmatprep.subr.mxu0 0.0
    %539 = vmatpush1.msra.mxu0 0.0
    %540 = vmatprep.subr.mxu0 0.0
    %541 = vmatpush1.msra.mxu0 0.0
    %542 = vmatprep.subr.mxu0 0.0
    %543 = vmatpush1.msra.mxu0 0.0
    %544 = vmatprep.subr.mxu0 0.0
    %545 = vmatpush1.msra.mxu0 0.0
    %546 = vmatprep.subr.mxu0 0.0
    %547 = vmatpush1.msra.mxu0 0.0
    %548 = vmatprep.subr.mxu0 0.0
    %549 = vmatpush1.msra.mxu0 0.0
    %550 = vmatprep.subr.mxu0 0.0
    %551 = vmatpush1.msra.mxu0 0.0
    %552 = vmatprep.subr.mxu0 0.0
    %553 = vmatpush1.msra.mxu0 0.0
    %554 = vmatprep.subr.mxu0 0.0
    %555 = vmatpush1.msra.mxu0 0.0
    %556 = vmatprep.subr.mxu0 0.0
    %557 = vmatpush1.msra.mxu0 0.0
    %558 = vmatprep.subr.mxu0 0.0
    %559 = vmatpush1.msra.mxu0 0.0
    %560 = vmatprep.subr.mxu0 0.0
    %561 = vmatpush1.msra.mxu0 0.0
    %562 = vmatprep.subr.mxu0 0.0
    %563 = vmatpush1.msra.mxu0 0.0
    %564 = vmatprep.mubr.f32.mxu0 0.0
    %565 = vmatmul.mubr.f32.gmra.mrb[0].mxu0 %v498
    %v566 = vpop.f32.mrb[0].mxu0
    %v567 = vadd.f32 0.0, %v566
    %v568 = vpop.f32.mrb[0].mxu0
    %569 = vdwg.mxu0
    %v570 = vadd.f32 %v496, %v567
    %v571 = vtanh.pop %v570
    %572 = vst.msk [vmem:[#allocation3 + $0x8] sm:$0x3] %vm263, %v571
    %v573 = vld [vmem:[#allocation2 + $0xa] sm:$0x3]
    %v575 = vsel %vm98, %v571, 0
    %577 = vmatprep.subr.mxu0 0.0
    %578 = vmatpush1.msra.mxu0 %v182
    %579 = vmatprep.subr.mxu0 0.0
    %580 = vmatpush1.msra.mxu0 %v183
    %581 = vmatprep.subr.mxu0 0.0
    %582 = vmatpush1.msra.mxu0 %v184
    %583 = vmatprep.subr.mxu0 0.0
    %584 = vmatpush1.msra.mxu0 %v185
    %585 = vmatprep.subr.mxu0 0.0
    %586 = vmatpush1.msra.mxu0 0.0
    %587 = vmatprep.subr.mxu0 0.0
    %588 = vmatpush1.msra.mxu0 0.0
    %589 = vmatprep.subr.mxu0 0.0
    %590 = vmatpush1.msra.mxu0 0.0
    %591 = vmatprep.subr.mxu0 0.0
    %592 = vmatpush1.msra.mxu0 0.0
    %593 = vmatprep.subr.mxu0 0.0
    %594 = vmatpush1.msra.mxu0 0.0
    %595 = vmatprep.subr.mxu0 0.0
    %596 = vmatpush1.msra.mxu0 0.0
    %597 = vmatprep.subr.mxu0 0.0
    %598 = vmatpush1.msra.mxu0 0.0
    %599 = vmatprep.subr.mxu0 0.0
    %600 = vmatpush1.msra.mxu0 0.0
    %601 = vmatprep.subr.mxu0 0.0
    %602 = vmatpush1.msra.mxu0 0.0
    %603 = vmatprep.subr.mxu0 0.0
    %604 = vmatpush1.msra.mxu0 0.0
    %605 = vmatprep.subr.mxu0 0.0
    %606 = vmatpush1.msra.mxu0 0.0
    %607 = vmatprep.subr.mxu0 0.0
    %608 = vmatpush1.msra.mxu0 0.0
    %609 = vmatprep.subr.mxu0 0.0
    %610 = vmatpush1.msra.mxu0 0.0
    %611 = vmatprep.subr.mxu0 0.0
    %612 = vmatpush1.msra.mxu0 0.0
    %613 = vmatprep.subr.mxu0 0.0
    %614 = vmatpush1.msra.mxu0 0.0
    %615 = vmatprep.subr.mxu0 0.0
    %616 = vmatpush1.msra.mxu0 0.0
    %617 = vmatprep.subr.mxu0 0.0
    %618 = vmatpush1.msra.mxu0 0.0
    %619 = vmatprep.subr.mxu0 0.0
    %620 = vmatpush1.msra.mxu0 0.0
    %621 = vmatprep.subr.mxu0 0.0
    %622 = vmatpush1.msra.mxu0 0.0
    %623 = vmatprep.subr.mxu0 0.0
    %624 = vmatpush1.msra.mxu0 0.0
    %625 = vmatprep.subr.mxu0 0.0
    %626 = vmatpush1.msra.mxu0 0.0
    %627 = vmatprep.subr.mxu0 0.0
    %628 = vmatpush1.msra.mxu0 0.0
    %629 = vmatprep.subr.mxu0 0.0
    %630 = vmatpush1.msra.mxu0 0.0
    %631 = vmatprep.subr.mxu0 0.0
    %632 = vmatpush1.msra.mxu0 0.0
    %633 = vmatprep.subr.mxu0 0.0
    %634 = vmatpush1.msra.mxu0 0.0
    %635 = vmatprep.subr.mxu0 0.0
    %636 = vmatpush1.msra.mxu0 0.0
    %637 = vmatprep.subr.mxu0 0.0
    %638 = vmatpush1.msra.mxu0 0.0
    %639 = vmatprep.subr.mxu0 0.0
    %640 = vmatpush1.msra.mxu0 0.0
    %641 = vmatprep.mubr.f32.mxu0 0.0
    %642 = vmatmul.mubr.f32.gmra.mrb[0].mxu0 %v575
    %v643 = vpop.f32.mrb[0].mxu0
    %v644 = vadd.f32 0.0, %v643
    %v645 = vpop.f32.mrb[0].mxu0
    %646 = vdwg.mxu0
    %v647 = vadd.f32 %v573, %v644
    %v648 = vtanh.pop %v647
    %649 = vst.msk [vmem:[#allocation3 + $0xa] sm:$0x3] %vm263, %v648
    %v650 = vld [vmem:[#allocation2 + $0xc] sm:$0x3]
    %v652 = vsel %vm98, %v648, 0
    %654 = vmatprep.subr.mxu0 0.0
    %655 = vmatpush1.msra.mxu0 %v182
    %656 = vmatprep.subr.mxu0 0.0
    %657 = vmatpush1.msra.mxu0 %v183
    %658 = vmatprep.subr.mxu0 0.0
    %659 = vmatpush1.msra.mxu0 %v184
    %660 = vmatprep.subr.mxu0 0.0
    %661 = vmatpush1.msra.mxu0 %v185
    %662 = vmatprep.subr.mxu0 0.0
    %663 = vmatpush1.msra.mxu0 0.0
    %664 = vmatprep.subr.mxu0 0.0
    %665 = vmatpush1.msra.mxu0 0.0
    %666 = vmatprep.subr.mxu0 0.0
    %667 = vmatpush1.msra.mxu0 0.0
    %668 = vmatprep.subr.mxu0 0.0
    %669 = vmatpush1.msra.mxu0 0.0
    %670 = vmatprep.subr.mxu0 0.0
    %671 = vmatpush1.msra.mxu0 0.0
    %672 = vmatprep.subr.mxu0 0.0
    %673 = vmatpush1.msra.mxu0 0.0
    %674 = vmatprep.subr.mxu0 0.0
    %675 = vmatpush1.msra.mxu0 0.0
    %676 = vmatprep.subr.mxu0 0.0
    %677 = vmatpush1.msra.mxu0 0.0
    %678 = vmatprep.subr.mxu0 0.0
    %679 = vmatpush1.msra.mxu0 0.0
    %680 = vmatprep.subr.mxu0 0.0
    %681 = vmatpush1.msra.mxu0 0.0
    %682 = vmatprep.subr.mxu0 0.0
    %683 = vmatpush1.msra.mxu0 0.0
    %684 = vmatprep.subr.mxu0 0.0
    %685 = vmatpush1.msra.mxu0 0.0
    %686 = vmatprep.subr.mxu0 0.0
    %687 = vmatpush1.msra.mxu0 0.0
    %688 = vmatprep.subr.mxu0 0.0
    %689 = vmatpush1.msra.mxu0 0.0
    %690 = vmatprep.subr.mxu0 0.0
    %691 = vmatpush1.msra.mxu0 0.0
    %692 = vmatprep.subr.mxu0 0.0
    %693 = vmatpush1.msra.mxu0 0.0
    %694 = vmatprep.subr.mxu0 0.0
    %695 = vmatpush1.msra.mxu0 0.0
    %696 = vmatprep.subr.mxu0 0.0
    %697 = vmatpush1.msra.mxu0 0.0
    %698 = vmatprep.subr.mxu0 0.0
    %699 = vmatpush1.msra.mxu0 0.0
    %700 = vmatprep.subr.mxu0 0.0
    %701 = vmatpush1.msra.mxu0 0.0
    %702 = vmatprep.subr.mxu0 0.0
    %703 = vmatpush1.msra.mxu0 0.0
    %704 = vmatprep.subr.mxu0 0.0
    %705 = vmatpush1.msra.mxu0 0.0
    %706 = vmatprep.subr.mxu0 0.0
    %707 = vmatpush1.msra.mxu0 0.0
    %708 = vmatprep.subr.mxu0 0.0
    %709 = vmatpush1.msra.mxu0 0.0
    %710 = vmatprep.subr.mxu0 0.0
    %711 = vmatpush1.msra.mxu0 0.0
    %712 = vmatprep.subr.mxu0 0.0
    %713 = vmatpush1.msra.mxu0 0.0
    %714 = vmatprep.subr.mxu0 0.0
    %715 = vmatpush1.msra.mxu0 0.0
    %716 = vmatprep.subr.mxu0 0.0
    %717 = vmatpush1.msra.mxu0 0.0
    %718 = vmatprep.mubr.f32.mxu0 0.0
    %719 = vmatmul.mubr.f32.gmra.mrb[0].mxu0 %v652
    %v720 = vpop.f32.mrb[0].mxu0
    %v721 = vadd.f32 0.0, %v720
    %v722 = vpop.f32.mrb[0].mxu0
    %723 = vdwg.mxu0
    %v724 = vadd.f32 %v650, %v721
    %v725 = vtanh.pop %v724
    %726 = vst.msk [vmem:[#allocation3 + $0xc] sm:$0x3] %vm263, %v725
    %v727 = vld [vmem:[#allocation2 + $0xe] sm:$0x3]
    %v729 = vsel %vm98, %v725, 0
    %731 = vmatprep.subr.mxu0 0.0
    %732 = vmatpush1.msra.mxu0 %v182
    %733 = vmatprep.subr.mxu0 0.0
    %734 = vmatpush1.msra.mxu0 %v183
    %735 = vmatprep.subr.mxu0 0.0
    %736 = vmatpush1.msra.mxu0 %v184
    %737 = vmatprep.subr.mxu0 0.0
    %738 = vmatpush1.msra.mxu0 %v185
    %739 = vmatprep.subr.mxu0 0.0
    %740 = vmatpush1.msra.mxu0 0.0
    %741 = vmatprep.subr.mxu0 0.0
    %742 = vmatpush1.msra.mxu0 0.0
    %743 = vmatprep.subr.mxu0 0.0
    %744 = vmatpush1.msra.mxu0 0.0
    %745 = vmatprep.subr.mxu0 0.0
    %746 = vmatpush1.msra.mxu0 0.0
    %747 = vmatprep.subr.mxu0 0.0
    %748 = vmatpush1.msra.mxu0 0.0
    %749 = vmatprep.subr.mxu0 0.0
    %750 = vmatpush1.msra.mxu0 0.0
    %751 = vmatprep.subr.mxu0 0.0
    %752 = vmatpush1.msra.mxu0 0.0
    %753 = vmatprep.subr.mxu0 0.0
    %754 = vmatpush1.msra.mxu0 0.0
    %755 = vmatprep.subr.mxu0 0.0
    %756 = vmatpush1.msra.mxu0 0.0
    %757 = vmatprep.subr.mxu0 0.0
    %758 = vmatpush1.msra.mxu0 0.0
    %759 = vmatprep.subr.mxu0 0.0
    %760 = vmatpush1.msra.mxu0 0.0
    %761 = vmatprep.subr.mxu0 0.0
    %762 = vmatpush1.msra.mxu0 0.0
    %763 = vmatprep.subr.mxu0 0.0
    %764 = vmatpush1.msra.mxu0 0.0
    %765 = vmatprep.subr.mxu0 0.0
    %766 = vmatpush1.msra.mxu0 0.0
    %767 = vmatprep.subr.mxu0 0.0
    %768 = vmatpush1.msra.mxu0 0.0
    %769 = vmatprep.subr.mxu0 0.0
    %770 = vmatpush1.msra.mxu0 0.0
    %771 = vmatprep.subr.mxu0 0.0
    %772 = vmatpush1.msra.mxu0 0.0
    %773 = vmatprep.subr.mxu0 0.0
    %774 = vmatpush1.msra.mxu0 0.0
    %775 = vmatprep.subr.mxu0 0.0
    %776 = vmatpush1.msra.mxu0 0.0
    %777 = vmatprep.subr.mxu0 0.0
    %778 = vmatpush1.msra.mxu0 0.0
    %779 = vmatprep.subr.mxu0 0.0
    %780 = vmatpush1.msra.mxu0 0.0
    %781 = vmatprep.subr.mxu0 0.0
    %782 = vmatpush1.msra.mxu0 0.0
    %783 = vmatprep.subr.mxu0 0.0
    %784 = vmatpush1.msra.mxu0 0.0
    %785 = vmatprep.subr.mxu0 0.0
    %786 = vmatpush1.msra.mxu0 0.0
    %787 = vmatprep.subr.mxu0 0.0
    %788 = vmatpush1.msra.mxu0 0.0
    %789 = vmatprep.subr.mxu0 0.0
    %790 = vmatpush1.msra.mxu0 0.0
    %791 = vmatprep.subr.mxu0 0.0
    %792 = vmatpush1.msra.mxu0 0.0
    %793 = vmatprep.subr.mxu0 0.0
    %794 = vmatpush1.msra.mxu0 0.0
    %795 = vmatprep.mubr.f32.mxu0 0.0
    %796 = vmatmul.mubr.f32.gmra.mrb[0].mxu0 %v729
    %v797 = vpop.f32.mrb[0].mxu0
    %v798 = vadd.f32 0.0, %v797
    %v799 = vpop.f32.mrb[0].mxu0
    %800 = vdwg.mxu0
    %v801 = vadd.f32 %v727, %v798
    %v802 = vtanh.pop %v801
    %803 = vst.msk [vmem:[#allocation3 + $0xe] sm:$0x3] %vm263, %v802
    %v804 = vld [vmem:[#allocation3] sm:$0xff]
    %v805 = vld [vmem:[#allocation3 + $0x8] sm:$0xff]
    %v806 = vld [vmem:[#allocation10] sm:$0xff]
    %v807 = vld [vmem:[#allocation10 + $0x8] sm:$0xff]
    %v808 = vld [vmem:[#allocation10 + $0x10] sm:$0xff]
    %v809 = vld [vmem:[#allocation10 + $0x18] sm:$0xff]
    %v810 = vld [vmem:[%s6] sm:$0x1]
    %v812 = vlaneseq
    %v813 = vshrl.u32 %v812, 7
    %v814 = vsub.s32 0, %v813
    %v815 = vrot.slane %v810, %v814
    %v818 = vsel %vm98, %v804, 0
    %v821 = vsel %vm98, %v805, 0
    %823 = vmatprep.subr.mxu0 0.0
    %824 = vmatpush1.msra.mxu0 %v806
    %825 = vmatprep.subr.mxu0 0.0
    %826 = vmatpush1.msra.mxu0 %v807
    %827 = vmatprep.subr.mxu0 0.0
    %828 = vmatpush1.msra.mxu0 %v808
    %829 = vmatprep.subr.mxu0 0.0
    %830 = vmatpush1.msra.mxu0 %v809
    %831 = vmatprep.subr.mxu0 0.0
    %832 = vmatpush1.msra.mxu0 0.0
    %833 = vmatprep.subr.mxu0 0.0
    %834 = vmatpush1.msra.mxu0 0.0
    %835 = vmatprep.subr.mxu0 0.0
    %836 = vmatpush1.msra.mxu0 0.0
    %837 = vmatprep.subr.mxu0 0.0
    %838 = vmatpush1.msra.mxu0 0.0
    %839 = vmatprep.subr.mxu0 0.0
    %840 = vmatpush1.msra.mxu0 0.0
    %841 = vmatprep.subr.mxu0 0.0
    %842 = vmatpush1.msra.mxu0 0.0
    %843 = vmatprep.subr.mxu0 0.0
    %844 = vmatpush1.msra.mxu0 0.0
    %845 = vmatprep.subr.mxu0 0.0
    %846 = vmatpush1.msra.mxu0 0.0
    %847 = vmatprep.subr.mxu0 0.0
    %848 = vmatpush1.msra.mxu0 0.0
    %849 = vmatprep.subr.mxu0 0.0
    %850 = vmatpush1.msra.mxu0 0.0
    %851 = vmatprep.subr.mxu0 0.0
    %852 = vmatpush1.msra.mxu0 0.0
    %853 = vmatprep.subr.mxu0 0.0
    %854 = vmatpush1.msra.mxu0 0.0
    %855 = vmatprep.subr.mxu0 0.0
    %856 = vmatpush1.msra.mxu0 0.0
    %857 = vmatprep.subr.mxu0 0.0
    %858 = vmatpush1.msra.mxu0 0.0
    %859 = vmatprep.subr.mxu0 0.0
    %860 = vmatpush1.msra.mxu0 0.0
    %861 = vmatprep.subr.mxu0 0.0
    %862 = vmatpush1.msra.mxu0 0.0
    %863 = vmatprep.subr.mxu0 0.0
    %864 = vmatpush1.msra.mxu0 0.0
    %865 = vmatprep.subr.mxu0 0.0
    %866 = vmatpush1.msra.mxu0 0.0
    %867 = vmatprep.subr.mxu0 0.0
    %868 = vmatpush1.msra.mxu0 0.0
    %869 = vmatprep.subr.mxu0 0.0
    %870 = vmatpush1.msra.mxu0 0.0
    %871 = vmatprep.subr.mxu0 0.0
    %872 = vmatpush1.msra.mxu0 0.0
    %873 = vmatprep.subr.mxu0 0.0
    %874 = vmatpush1.msra.mxu0 0.0
    %875 = vmatprep.subr.mxu0 0.0
    %876 = vmatpush1.msra.mxu0 0.0
    %877 = vmatprep.subr.mxu0 0.0
    %878 = vmatpush1.msra.mxu0 0.0
    %879 = vmatprep.subr.mxu0 0.0
    %880 = vmatpush1.msra.mxu0 0.0
    %881 = vmatprep.subr.mxu0 0.0
    %882 = vmatpush1.msra.mxu0 0.0
    %883 = vmatprep.subr.mxu0 0.0
    %884 = vmatpush1.msra.mxu0 0.0
    %885 = vmatprep.subr.mxu0 0.0
    %886 = vmatpush1.msra.mxu0 0.0
    %887 = vmatprep.mubr.f32.mxu0 0.0
    %888 = vmatmul.mubr.f32.gmra.mrb[0].mxu0 %v818
    %v889 = vpop.f32.mrb[0].mxu0
    %v890 = vadd.f32 %v815, %v889
    %v891 = vpop.f32.mrb[0].mxu0
    %892 = vmatprep.mubr.f32.mxu0 0.0
    %893 = vmatmul.mubr.f32.gmra.mrb[0].mxu0 %v821
    %v894 = vpop.f32.mrb[0].mxu0
    %v895 = vadd.f32 %v815, %v894
    %v896 = vpop.f32.mrb[0].mxu0
    %897 = vdwg.mxu0
    %898 = vst [vmem:[#allocation12] sm:$0xff] %v890
    %899 = vst [vmem:[#allocation12 + $0x8] sm:$0xff] %v895
    %900 = vst.msk [vmem:[#allocation13] sm:$0x3] %vm263, %v802
    // Predicated region
    $region46: #{tpu_custom_call.1} parent=1 // pred_check
      _
    $region47: #{tpu_custom_call.1} parent=1 // pred_check_branch
      %902 = sbr.rel (0) target = $region49
    $region48: #{tpu_custom_call.1} parent=1 // pred_region
      %s904 = ssub.s32 256, 256
      %905 = vsyncadd [#allocation6], %s904
      %s906 = sshll.u32 [#allocation12], 4
      %s907 = int_to_ptr.vmem [resolvable:$true] %s906
      %912 = dma.vmem_to_hbm [thread:$0]  %s907, 256, %s7, [#allocation6], 128, 128, 8
    $region49: #{tpu_custom_call.1} parent=1 // pred_fallthru
      _
    // Predicated region
    $region50: #{tpu_custom_call.1} parent=1 // pred_check
      _
    $region51: #{tpu_custom_call.1} parent=1 // pred_check_branch
      %914 = sbr.rel (0) target = $region53
    $region52: #{tpu_custom_call.1} parent=1 // pred_region
      %s916 = ssub.s32 32, 32
      %917 = vsyncadd [#allocation14], %s916
      %s919 = sshll.u32 [#allocation13], 4
      %s920 = int_to_ptr.vmem [resolvable:$true] %s919
      %922 = dma.vmem_to_hbm [thread:$0]  %s920, 32, %s8, [#allocation14]
    $region53: #{tpu_custom_call.1} parent=1 // pred_fallthru
      _
    // Predicated region
    $region54: #{tpu_custom_call.1} parent=1 // pred_check
      _
    $region55: #{tpu_custom_call.1} parent=1 // pred_check_branch
      %924 = sbr.rel (0) target = $region57
    $region56: #{tpu_custom_call.1} parent=1 // pred_region
      %925 = dma.done [#allocation6], 256
    $region57: #{tpu_custom_call.1} parent=1 // pred_fallthru
      _
    // Predicated region
    $region58: #{tpu_custom_call.1} parent=1 // pred_check
      _
    $region59: #{tpu_custom_call.1} parent=1 // pred_check_branch
      %927 = sbr.rel (0) target = $region61
    $region60: #{tpu_custom_call.1} parent=1 // pred_region
      %928 = dma.done [#allocation14], 32
    $region61: #{tpu_custom_call.1} parent=1 // pred_fallthru
      _
    %929 = vsyncpa [#allocation5], 1
    %930 = vsyncpa [#allocation8], 1
    %931 = vsyncpa [#allocation11], 1
    %932 = vsyncpa [#allocation6], 1
    %933 = vsyncpa [#allocation14], 1

</llo_original>
